<compile_context>
chip_gen: v6e
topology: v6e:2x2x1
jax: 0.10.0
libtpu: 0.0.40
codegen_flags: <defaults>
</compile_context>

<pallas_src>
import functools

import jax
import jax.numpy as jnp
from jax.experimental import pallas as pl
from jax.experimental.pallas import tpu as pltpu


def _channel_embedding_kernel(x_ref, gwc_ref, gcc_ref, beta_ref, stats_ref, o_ref,
                              *, n_pos, tile_ba, width, eps):
    """One grid step: produce a (tile_ba, L, W, D) output block.

    x_ref:     (tile_ba*W, L) VMEM  rows = (ba, w) on sublanes, position on lanes
    gwc_ref:   (1, D)         VMEM  gamma * (w - mean(w))
    gcc_ref:   (L, D)         VMEM  gamma * (c_p - mean(c_p)),  c_p = lin_b + emb[p]
    beta_ref:  (1, D)         VMEM  LayerNorm beta
    stats_ref: (3, L)         SMEM  rows: Var(w), 2*Cov(w, c_p), Var(c_p)
    o_ref:     (tile_ba, L, W, D)
    """
    gwc = gwc_ref[...]                       # (1, D), loop-invariant
    beta = beta_ref[...]                     # (1, D)

    # max_len is tiny and static -> unrolled Python loop.  Everything large is
    # produced and consumed within a single position (bounded live ranges).
    for p in range(n_pos):
        xcol = x_ref[:, p:p + 1]                                   # (R, 1)
        varw = stats_ref[0, p]                                     # SMEM scalars
        cov2 = stats_ref[1, p]
        varc = stats_ref[2, p]
        # Closed-form per-row LayerNorm variance; clamp >= 0 (fp32 cancellation
        # can make it slightly negative for large |x| and NaN the rsqrt).
        var = (xcol * varw + cov2) * xcol + varc                   # (R, 1)
        inv = jax.lax.rsqrt(jnp.maximum(var, 0.0) + eps)           # (R, 1)  EUP
        y = (xcol * gwc + gcc_ref[p:p + 1, :]) * inv + beta        # (R, D)  lane-dense
        # W % 8 == 0 and D % 128 == 0 (asserted in the wrapper) keep this reshape
        # layout-free and the store full-lane (unmasked vst).
        o_ref[:, p:p + 1, :, :] = y.reshape(tile_ba, 1, width, -1).astype(o_ref.dtype)


def channel_embedding_forward(x, params, *, block_bytes=8 * 1024 * 1024,
                              out_dtype=jnp.float32):
    """x: (B, A, L, W) float32, L == max_len. Returns (B, A, L, W, d_model)."""
    lin_w = params["lin_w"].astype(jnp.float32)   # (D, 1)   Linear(1, D) weight
    lin_b = params["lin_b"].astype(jnp.float32)   # (D,)
    emb = params["emb"].astype(jnp.float32)       # (L, D)   Embedding(max_len, D)
    ln_g = params["ln_g"].astype(jnp.float32)     # (D,)
    ln_b = params["ln_b"].astype(jnp.float32)     # (D,)

    assert x.ndim == 4, x.shape
    B, A, L, W = x.shape
    max_len, D = emb.shape
    assert L == max_len, "third input axis must equal max_len (broadcast target)"
    # Layout contract: W sits on the output-tile sublanes, D on the lanes.
    assert W % 8 == 0, f"W={W} must be a multiple of 8 (sublane-aligned stores)"
    assert D % 128 == 0, f"d_model={D} must be a multiple of 128 (lane-dense stores)"
    BA = B * A

    # x rows ordered (b, a, w) to match the output layout; positions on lanes.
    # This touches only x (D times smaller than the output) -> negligible traffic.
    # TODO(synk): this (BA*W, L) layout lane-pads L -> 128 in HBM (~1/6 extra read
    # traffic on a write-bound kernel); removing it needs a lane->sublane relayout
    # in-kernel (or bf16 x), left out here to keep lowering risk at zero.
    x_rows = jnp.transpose(x.astype(jnp.float32).reshape(BA, L, W),
                           (0, 2, 1)).reshape(BA * W, L)

    # Closed-form LayerNorm coefficients (tiny, computed once in the wrapper).
    w_col = lin_w.reshape(D)                       # Linear(1, D) weight column
    c = lin_b[None, :] + emb                       # (L, D)   bias + embedding
    w_bar = jnp.mean(w_col)
    c_bar = jnp.mean(c, axis=1, keepdims=True)     # (L, 1)
    wc = w_col - w_bar                             # (D,)
    cc = c - c_bar                                 # (L, D)
    varw = jnp.mean(wc * wc)                       # scalar
    cov = jnp.mean(wc[None, :] * cc, axis=1)       # (L,)
    varc = jnp.mean(cc * cc, axis=1)               # (L,)

    gwc = (ln_g * wc)[None, :]                     # (1, D)
    gcc = ln_g[None, :] * cc                       # (L, D)
    beta = ln_b[None, :]                           # (1, D)
    stats = jnp.stack([jnp.broadcast_to(varw, (L,)), 2.0 * cov, varc],
                      axis=0).astype(jnp.float32)  # (3, L) -> SMEM

    # --- Tiling over the fused B*A axis (positions handled inside the kernel). ---
    out_itemsize = jnp.dtype(out_dtype).itemsize
    bytes_per_ba_row = L * W * D * out_itemsize
    tile_ba = int(min(BA, max(1, block_bytes // bytes_per_ba_row)))
    steps = pl.cdiv(BA, tile_ba)
    # Guarantee >= 2 (preferably even) parallel steps so both v7x TensorCores get
    # work; a ragged last block is fine (cdiv grid, no divisibility requirement).
    if steps == 1 and BA >= 2:
        steps = 2
    elif steps > 1 and steps % 2 and steps < BA:
        steps += 1
    tile_ba = int(pl.cdiv(BA, steps))
    grid = (pl.cdiv(BA, tile_ba),)

    # Explicit scoped-VMEM budget: double-buffered output + double-buffered
    # (lane-padded) x block + params, with headroom.  Raises v5e's 16 MiB scoped
    # default when needed and stays well under v7x's 64 MiB physical VMEM.
    out_block_bytes = tile_ba * L * W * D * out_itemsize
    x_block_bytes = ((tile_ba * W + 7) // 8) * 8 * 128 * 4          # lane-padded
    param_bytes = (2 * D + L * D + 3 * L) * 4
    vmem_limit = 2 * (out_block_bytes + x_block_bytes) + param_bytes + (1 << 20)
    vmem_limit = int(min(max(vmem_limit + vmem_limit // 4, 16 * 1024 * 1024),
                         48 * 1024 * 1024))

    kernel = functools.partial(_channel_embedding_kernel,
                               n_pos=L, tile_ba=tile_ba, width=W, eps=1e-5)

    out = pl.pallas_call(
        kernel,
        out_shape=jax.ShapeDtypeStruct((BA, L, W, D), out_dtype),
        grid_spec=pltpu.PrefetchScalarGridSpec(
            num_scalar_prefetch=0,
            grid=grid,
            in_specs=[
                pl.BlockSpec((tile_ba * W, L), lambda r: (r, 0)),   # x rows
                pl.BlockSpec((1, D), lambda r: (0, 0)),             # gamma*(w - w_bar)
                pl.BlockSpec((L, D), lambda r: (0, 0)),             # gamma*(c - c_bar)
                pl.BlockSpec((1, D), lambda r: (0, 0)),             # beta
                pl.BlockSpec(memory_space=pltpu.MemorySpace.SMEM),  # variance stats
            ],
            out_specs=pl.BlockSpec((tile_ba, L, W, D), lambda r: (r, 0, 0, 0)),
        ),
        compiler_params=pltpu.CompilerParams(
            dimension_semantics=("parallel",),
            vmem_limit_bytes=vmem_limit,
        ),
    )(x_rows, gwc, gcc, beta, stats)

    # Leading-dim split only (layout-free) -> (B, A, L, W, D).
    return out.reshape(B, A, L, W, D)


def _reference(x, params):
    """Pure-JAX reference mirroring the PyTorch forward."""
    lin_w, lin_b, emb_t = params["lin_w"], params["lin_b"], params["emb"]
    ln_g, ln_b = params["ln_g"], params["ln_b"]
    y = x[..., None] * lin_w[:, 0] + lin_b                 # Linear(1, D)
    y = y + emb_t[None, None, :, None, :]                  # + Embedding(channel_pos)
    mu = jnp.mean(y, axis=-1, keepdims=True)
    var = jnp.mean(jnp.square(y - mu), axis=-1, keepdims=True)
    return (y - mu) * jax.lax.rsqrt(var + 1e-5) * ln_g + ln_b


if __name__ == "__main__":
    kernal, d_model, max_len = 1, 256, 3
    B, A, W = 3, 3, 8                      # BA=9 -> exercises the ragged cdiv grid

    key = jax.random.PRNGKey(0)
    k_x, k_emb, k_w, k_b, k_g, k_bt = jax.random.split(key, 6)

    # Deterministic synthetic parameters (shapes from the module's __init__).
    params = {
        "emb": jax.random.normal(k_emb, (max_len, d_model), jnp.float32),
        "lin_w": jax.random.normal(k_w, (d_model, kernal), jnp.float32) * 0.5,
        "lin_b": jax.random.normal(k_b, (d_model,), jnp.float32) * 0.1,
        "ln_g": 1.0 + 0.1 * jax.random.normal(k_g, (d_model,), jnp.float32),
        "ln_b": 0.1 * jax.random.normal(k_bt, (d_model,), jnp.float32),
    }
    x = jax.random.normal(k_x, (B, A, max_len, W), jnp.float32)

    out = jax.block_until_ready(channel_embedding_forward(x, params))
    ref = _reference(x, params)

    assert out.shape == (B, A, max_len, W, d_model), out.shape
    max_err = float(jnp.max(jnp.abs(out - ref)))
    assert jnp.allclose(out, ref, atol=3e-5, rtol=3e-5), max_err

    print("KERNEL_OK")
</pallas_src>

<mosaic_0001>
module attributes {stable_mosaic.version = 11 : i64} {
  func.func @_channel_embedding_kernel(%arg0: i32, %arg1: memref<40x3xf32, #tpu.memory_space<vmem>>, %arg2: memref<1x256xf32, #tpu.memory_space<vmem>>, %arg3: memref<3x256xf32, #tpu.memory_space<vmem>>, %arg4: memref<1x256xf32, #tpu.memory_space<vmem>>, %arg5: memref<3x3xf32, #tpu.memory_space<smem>>, %arg6: memref<5x3x8x256xf32, #tpu.memory_space<vmem>>) attributes {dimension_semantics = [#tpu.dimension_semantics<parallel>], iteration_bounds = array<i64: 2>, scalar_prefetch = 0 : i64, scratch_operands = 0 : i64, tpu.core_type = #tpu.core_type<tc>, window_params = [{transform_indices = @transform_0, window_bounds = array<i64: 40, 3>}, {pipeline_mode = #tpu.pipeline_mode<synchronous>, transform_indices = @transform_1, window_bounds = array<i64: 1, 256>}, {pipeline_mode = #tpu.pipeline_mode<synchronous>, transform_indices = @transform_2, window_bounds = array<i64: 3, 256>}, {pipeline_mode = #tpu.pipeline_mode<synchronous>, transform_indices = @transform_3, window_bounds = array<i64: 1, 256>}, {transform_indices = @transform_4, window_bounds = array<i64: 3, 3>}, {transform_indices = @transform_5, window_bounds = array<i64: 5, 3, 8, 256>}]} {
    %c0 = arith.constant 0 : index
    %c0_0 = arith.constant 0 : index
    %0 = vector.load %arg2[%c0, %c0_0] : memref<1x256xf32, #tpu.memory_space<vmem>>, vector<1x256xf32>
    %c0_1 = arith.constant 0 : index
    %c0_2 = arith.constant 0 : index
    %1 = vector.load %arg4[%c0_1, %c0_2] : memref<1x256xf32, #tpu.memory_space<vmem>>, vector<1x256xf32>
    %c0_3 = arith.constant 0 : index
    %c0_4 = arith.constant 0 : index
    %2 = vector.load %arg1[%c0_3, %c0_4] : memref<40x3xf32, #tpu.memory_space<vmem>>, vector<40x1xf32>
    %c0_5 = arith.constant 0 : index
    %c0_6 = arith.constant 0 : index
    %3 = memref.load %arg5[%c0_5, %c0_6] : memref<3x3xf32, #tpu.memory_space<smem>>
    %c1 = arith.constant 1 : index
    %c0_7 = arith.constant 0 : index
    %4 = memref.load %arg5[%c1, %c0_7] : memref<3x3xf32, #tpu.memory_space<smem>>
    %c2 = arith.constant 2 : index
    %c0_8 = arith.constant 0 : index
    %5 = memref.load %arg5[%c2, %c0_8] : memref<3x3xf32, #tpu.memory_space<smem>>
    %6 = vector.broadcast %3 : f32 to vector<40x1xf32>
    %7 = arith.mulf %2, %6 : vector<40x1xf32>
    %8 = vector.broadcast %4 : f32 to vector<40x1xf32>
    %9 = arith.addf %7, %8 : vector<40x1xf32>
    %10 = arith.mulf %9, %2 : vector<40x1xf32>
    %11 = vector.broadcast %5 : f32 to vector<40x1xf32>
    %12 = arith.addf %10, %11 : vector<40x1xf32>
    %cst = arith.constant 0.000000e+00 : f32
    %13 = vector.broadcast %cst : f32 to vector<40x1xf32>
    %14 = arith.maximumf %12, %13 : vector<40x1xf32>
    %cst_9 = arith.constant 9.99999974E-6 : f32
    %15 = vector.broadcast %cst_9 : f32 to vector<40x1xf32>
    %16 = arith.addf %14, %15 : vector<40x1xf32>
    %17 = math.rsqrt %16 : vector<40x1xf32>
    %18 = vector.broadcast %2 : vector<40x1xf32> to vector<40x256xf32>
    %19 = vector.broadcast %0 : vector<1x256xf32> to vector<40x256xf32>
    %20 = arith.mulf %18, %19 : vector<40x256xf32>
    %c0_10 = arith.constant 0 : index
    %c0_11 = arith.constant 0 : index
    %21 = vector.load %arg3[%c0_10, %c0_11] : memref<3x256xf32, #tpu.memory_space<vmem>>, vector<1x256xf32>
    %22 = vector.broadcast %21 : vector<1x256xf32> to vector<40x256xf32>
    %23 = arith.addf %20, %22 : vector<40x256xf32>
    %24 = vector.broadcast %17 : vector<40x1xf32> to vector<40x256xf32>
    %25 = arith.mulf %23, %24 : vector<40x256xf32>
    %26 = vector.broadcast %1 : vector<1x256xf32> to vector<40x256xf32>
    %27 = arith.addf %25, %26 : vector<40x256xf32>
    %28 = vector.shape_cast %27 : vector<40x256xf32> to vector<5x1x8x256xf32>
    %c0_12 = arith.constant 0 : index
    %c0_13 = arith.constant 0 : index
    %c0_14 = arith.constant 0 : index
    %c0_15 = arith.constant 0 : index
    %29 = vector.load %arg6[%c0_12, %c0_13, %c0_14, %c0_15] : memref<5x3x8x256xf32, #tpu.memory_space<vmem>>, vector<5x1x8x256xf32>
    tpu.vector_store %arg6[%c0_12, %c0_13, %c0_14, %c0_15], %28 {strides = array<i32>} : memref<5x3x8x256xf32, #tpu.memory_space<vmem>>, vector<5x1x8x256xf32>,
    %c0_16 = arith.constant 0 : index
    %c1_17 = arith.constant 1 : index
    %30 = vector.load %arg1[%c0_16, %c1_17] : memref<40x3xf32, #tpu.memory_space<vmem>>, vector<40x1xf32>
    %c0_18 = arith.constant 0 : index
    %c1_19 = arith.constant 1 : index
    %31 = memref.load %arg5[%c0_18, %c1_19] : memref<3x3xf32, #tpu.memory_space<smem>>
    %c1_20 = arith.constant 1 : index
    %c1_21 = arith.constant 1 : index
    %32 = memref.load %arg5[%c1_20, %c1_21] : memref<3x3xf32, #tpu.memory_space<smem>>
    %c2_22 = arith.constant 2 : index
    %c1_23 = arith.constant 1 : index
    %33 = memref.load %arg5[%c2_22, %c1_23] : memref<3x3xf32, #tpu.memory_space<smem>>
    %34 = vector.broadcast %31 : f32 to vector<40x1xf32>
    %35 = arith.mulf %30, %34 : vector<40x1xf32>
    %36 = vector.broadcast %32 : f32 to vector<40x1xf32>
    %37 = arith.addf %35, %36 : vector<40x1xf32>
    %38 = arith.mulf %37, %30 : vector<40x1xf32>
    %39 = vector.broadcast %33 : f32 to vector<40x1xf32>
    %40 = arith.addf %38, %39 : vector<40x1xf32>
    %cst_24 = arith.constant 0.000000e+00 : f32
    %41 = vector.broadcast %cst_24 : f32 to vector<40x1xf32>
    %42 = arith.maximumf %40, %41 : vector<40x1xf32>
    %cst_25 = arith.constant 9.99999974E-6 : f32
    %43 = vector.broadcast %cst_25 : f32 to vector<40x1xf32>
    %44 = arith.addf %42, %43 : vector<40x1xf32>
    %45 = math.rsqrt %44 : vector<40x1xf32>
    %46 = vector.broadcast %30 : vector<40x1xf32> to vector<40x256xf32>
    %47 = vector.broadcast %0 : vector<1x256xf32> to vector<40x256xf32>
    %48 = arith.mulf %46, %47 : vector<40x256xf32>
    %c1_26 = arith.constant 1 : index
    %c0_27 = arith.constant 0 : index
    %49 = vector.load %arg3[%c1_26, %c0_27] : memref<3x256xf32, #tpu.memory_space<vmem>>, vector<1x256xf32>
    %50 = vector.broadcast %49 : vector<1x256xf32> to vector<40x256xf32>
    %51 = arith.addf %48, %50 : vector<40x256xf32>
    %52 = vector.broadcast %45 : vector<40x1xf32> to vector<40x256xf32>
    %53 = arith.mulf %51, %52 : vector<40x256xf32>
    %54 = vector.broadcast %1 : vector<1x256xf32> to vector<40x256xf32>
    %55 = arith.addf %53, %54 : vector<40x256xf32>
    %56 = vector.shape_cast %55 : vector<40x256xf32> to vector<5x1x8x256xf32>
    %c0_28 = arith.constant 0 : index
    %c1_29 = arith.constant 1 : index
    %c0_30 = arith.constant 0 : index
    %c0_31 = arith.constant 0 : index
    %57 = vector.load %arg6[%c0_28, %c1_29, %c0_30, %c0_31] : memref<5x3x8x256xf32, #tpu.memory_space<vmem>>, vector<5x1x8x256xf32>
    tpu.vector_store %arg6[%c0_28, %c1_29, %c0_30, %c0_31], %56 {strides = array<i32>} : memref<5x3x8x256xf32, #tpu.memory_space<vmem>>, vector<5x1x8x256xf32>,
    %c0_32 = arith.constant 0 : index
    %c2_33 = arith.constant 2 : index
    %58 = vector.load %arg1[%c0_32, %c2_33] : memref<40x3xf32, #tpu.memory_space<vmem>>, vector<40x1xf32>
    %c0_34 = arith.constant 0 : index
    %c2_35 = arith.constant 2 : index
    %59 = memref.load %arg5[%c0_34, %c2_35] : memref<3x3xf32, #tpu.memory_space<smem>>
    %c1_36 = arith.constant 1 : index
    %c2_37 = arith.constant 2 : index
    %60 = memref.load %arg5[%c1_36, %c2_37] : memref<3x3xf32, #tpu.memory_space<smem>>
    %c2_38 = arith.constant 2 : index
    %c2_39 = arith.constant 2 : index
    %61 = memref.load %arg5[%c2_38, %c2_39] : memref<3x3xf32, #tpu.memory_space<smem>>
    %62 = vector.broadcast %59 : f32 to vector<40x1xf32>
    %63 = arith.mulf %58, %62 : vector<40x1xf32>
    %64 = vector.broadcast %60 : f32 to vector<40x1xf32>
    %65 = arith.addf %63, %64 : vector<40x1xf32>
    %66 = arith.mulf %65, %58 : vector<40x1xf32>
    %67 = vector.broadcast %61 : f32 to vector<40x1xf32>
    %68 = arith.addf %66, %67 : vector<40x1xf32>
    %cst_40 = arith.constant 0.000000e+00 : f32
    %69 = vector.broadcast %cst_40 : f32 to vector<40x1xf32>
    %70 = arith.maximumf %68, %69 : vector<40x1xf32>
    %cst_41 = arith.constant 9.99999974E-6 : f32
    %71 = vector.broadcast %cst_41 : f32 to vector<40x1xf32>
    %72 = arith.addf %70, %71 : vector<40x1xf32>
    %73 = math.rsqrt %72 : vector<40x1xf32>
    %74 = vector.broadcast %58 : vector<40x1xf32> to vector<40x256xf32>
    %75 = vector.broadcast %0 : vector<1x256xf32> to vector<40x256xf32>
    %76 = arith.mulf %74, %75 : vector<40x256xf32>
    %c2_42 = arith.constant 2 : index
    %c0_43 = arith.constant 0 : index
    %77 = vector.load %arg3[%c2_42, %c0_43] : memref<3x256xf32, #tpu.memory_space<vmem>>, vector<1x256xf32>
    %78 = vector.broadcast %77 : vector<1x256xf32> to vector<40x256xf32>
    %79 = arith.addf %76, %78 : vector<40x256xf32>
    %80 = vector.broadcast %73 : vector<40x1xf32> to vector<40x256xf32>
    %81 = arith.mulf %79, %80 : vector<40x256xf32>
    %82 = vector.broadcast %1 : vector<1x256xf32> to vector<40x256xf32>
    %83 = arith.addf %81, %82 : vector<40x256xf32>
    %84 = vector.shape_cast %83 : vector<40x256xf32> to vector<5x1x8x256xf32>
    %c0_44 = arith.constant 0 : index
    %c2_45 = arith.constant 2 : index
    %c0_46 = arith.constant 0 : index
    %c0_47 = arith.constant 0 : index
    %85 = vector.load %arg6[%c0_44, %c2_45, %c0_46, %c0_47] : memref<5x3x8x256xf32, #tpu.memory_space<vmem>>, vector<5x1x8x256xf32>
    tpu.vector_store %arg6[%c0_44, %c2_45, %c0_46, %c0_47], %84 {strides = array<i32>} : memref<5x3x8x256xf32, #tpu.memory_space<vmem>>, vector<5x1x8x256xf32>,
    return
  }
  func.func @transform_0(%arg0: i32) -> (i32, i32) {
    %c0_i32 = arith.constant 0 : i32
    %c0_i32_0 = arith.constant 0 : i32
    return %arg0, %c0_i32 : i32, i32
  }
  func.func @transform_1(%arg0: i32) -> (i32, i32) {
    %c0_i32 = arith.constant 0 : i32
    %c0_i32_0 = arith.constant 0 : i32
    %c0_i32_1 = arith.constant 0 : i32
    return %c0_i32, %c0_i32_0 : i32, i32
  }
  func.func @transform_2(%arg0: i32) -> (i32, i32) {
    %c0_i32 = arith.constant 0 : i32
    %c0_i32_0 = arith.constant 0 : i32
    %c0_i32_1 = arith.constant 0 : i32
    return %c0_i32, %c0_i32_0 : i32, i32
  }
  func.func @transform_3(%arg0: i32) -> (i32, i32) {
    %c0_i32 = arith.constant 0 : i32
    %c0_i32_0 = arith.constant 0 : i32
    %c0_i32_1 = arith.constant 0 : i32
    return %c0_i32, %c0_i32_0 : i32, i32
  }
  func.func @transform_4(%arg0: i32) -> (i32, i32) {
    %c0_i32 = arith.constant 0 : i32
    %c0_i32_0 = arith.constant 0 : i32
    %c0_i32_1 = arith.constant 0 : i32
    return %c0_i32, %c0_i32_0 : i32, i32
  }
  func.func @transform_5(%arg0: i32) -> (i32, i32, i32, i32) {
    %c0_i32 = arith.constant 0 : i32
    %c0_i32_0 = arith.constant 0 : i32
    %c0_i32_1 = arith.constant 0 : i32
    %c0_i32_2 = arith.constant 0 : i32
    return %arg0, %c0_i32, %c0_i32_0, %c0_i32_1 : i32, i32, i32, i32
  }
}

</mosaic_0001>

<llo_original>
// kernel: tpu_custom_call.1
$region0: #{tpu_custom_call.1}
  #allocation0 [shape = 'u32[]', space=smem, size = 0x4, offset = 0x4, fixed_abs, tag = 'smem constant byte address 0x4 - core index']
  #allocation1 [shape = 'u32[144,128]{1,0:T(1,128)}', space=vmem, size = 0x12000, scoped, tag = 'internal scratch']
  %s0 = inlined_call_operand.vmem [shape: f32[72,3], index: 0, kind: input, shape index: {}]
  %s1 = inlined_call_operand.vmem [shape: f32[1,256], index: 1, kind: input, shape index: {}]
  %s2 = inlined_call_operand.vmem [shape: f32[3,256], index: 2, kind: input, shape index: {}]
  %s3 = inlined_call_operand.vmem [shape: f32[1,256], index: 3, kind: input, shape index: {}]
  %s4 = inlined_call_operand.vmem [shape: f32[3,3], index: 4, kind: input, shape index: {}]
  %s5 = inlined_call_operand.hbm [shape: f32[9,3,8,256], index: 5, kind: output, shape index: {}]
  %s6 = sld [smem:[#allocation0]]
  $region57: #{tpu_custom_call.1} parent=0
    _
  %s8 = ssub.s32 1, %s6
  %s9 = scalar_select 0, %s8, %s6
  $region1: #{tpu_custom_call.1} parent=0
    #allocation2 [shape = 'u8[2048]{0}', space=smem, size = 0x800, scoped, tag = 'input window, operand 4, single buffered']
    #allocation3 [shape = 's32[2]{0}', space=sflag, size = 0x8, scoped, tag = 'scoped memory for tpu_custom_call.1']
    #allocation4 [shape = 's32[2]{0}', space=sflag, size = 0x8, scoped, tag = 'scoped memory for tpu_custom_call.1']
    #allocation5 [shape = 'u8[245760]{0}', space=vmem, size = 0x3c000, scoped, tag = 'output window, operand 0']
    %10 = vsyncpa [#allocation4], 0
    %11 = vsyncpa [#allocation3], 0
    %s12 = scalar_lea.sflag [#allocation3], 1
    %13 = vsyncpa %s12, 0
    loop: start=0, step=1, limit=4
    $region2: #{tpu_custom_call.1} parent=1 // loop_pre_header
      _
    $region3: #{tpu_custom_call.1} parent=1 // loop_header
      %s15 = sphi 0, %s19
      %p16 = scmp.ge.s32.totalorder %s15, 4
      %s25 = sphi 0, %s27
      %s28 = sphi 0, %s25
      %s29 = sphi 0, %s28
      %s45 = sphi 0, %s29
      %s49 = sphi 0, %s49
      %s51 = sphi 0, %s49
      %s52 = sphi 0, %s51
      %s66 = sphi 0, %s52
      %s70 = sphi 0, %s70
      %s72 = sphi 0, %s70
      %s73 = sphi 0, %s72
      %s87 = sphi 0, %s73
      %s91 = sphi 0, %s91
      %s93 = sphi 0, %s91
      %s94 = sphi 0, %s93
      %s108 = sphi 0, %s94
      %s112 = sphi 0, %s112
      %s114 = sphi 0, %s112
      %s115 = sphi 0, %s114
      %s129 = sphi 0, %s115
      %s135 = sphi 0, %s137
      %s138 = sphi 0, %s135
      %s139 = sphi 0, %s138
      %s155 = sphi 0, %s139
    $region4: #{tpu_custom_call.1} parent=1 // loop_header_branch
      %18 = sbr.rel (%p16) target = $region8
    $region5: #{tpu_custom_call.1} parent=1 // loop_body
      %s20 = ssub.s32 %s15, 1
      %s21 = ssub.s32 %s15, 2
      %s22 = sadd.s32 %s15, 1
      %s23 = ssub.s32 %s15, %s22
      %p24 = scmp.eq.s32.totalorder %s23, 0
      %s26 = sadd.s32 %s25, 1
      %s27 = scalar_select %p24, %s25, %s26
      %p30 = pneg %p24
      %p31 = scmp.eq.s32.totalorder %s15, 1
      %p32 = por %p30, %p31
      %p33 = scmp.ne.s32.totalorder %s25, %s28
      %p34 = scmp.eq.s32.totalorder %s15, 0
      %p35 = por %p33, %p34
      %p36 = scmp.ne.s32.totalorder %s25, %s28
      %p37 = scmp.eq.s32.totalorder %s20, 1
      %p38 = por %p36, %p37
      %p39 = scmp.ne.s32.totalorder %s28, %s29
      %p40 = scmp.eq.s32.totalorder %s20, 0
      %p41 = por %p39, %p40
      %p42 = scmp.ne.s32.totalorder %s28, %s29
      %p43 = scmp.eq.s32.totalorder %s21, 1
      %p44 = por %p42, %p43
      %p46 = scmp.ne.s32.totalorder %s29, %s45
      %p47 = scmp.eq.s32.totalorder %s21, 0
      %p48 = por %p46, %p47
      %s50 = sadd.s32 %s49, 1
      %p53 = scmp.eq.s32.totalorder %s15, 1
      %p54 = scmp.ne.s32.totalorder %s49, %s51
      %p55 = scmp.eq.s32.totalorder %s15, 0
      %p56 = por %p54, %p55
      %p57 = scmp.ne.s32.totalorder %s49, %s51
      %p58 = scmp.eq.s32.totalorder %s20, 1
      %p59 = por %p57, %p58
      %p60 = scmp.ne.s32.totalorder %s51, %s52
      %p61 = scmp.eq.s32.totalorder %s20, 0
      %p62 = por %p60, %p61
      %p63 = scmp.ne.s32.totalorder %s51, %s52
      %p64 = scmp.eq.s32.totalorder %s21, 1
      %p65 = por %p63, %p64
      %p67 = scmp.ne.s32.totalorder %s52, %s66
      %p68 = scmp.eq.s32.totalorder %s21, 0
      %p69 = por %p67, %p68
      %s71 = sadd.s32 %s70, 1
      %p74 = scmp.eq.s32.totalorder %s15, 1
      %p75 = scmp.ne.s32.totalorder %s70, %s72
      %p76 = scmp.eq.s32.totalorder %s15, 0
      %p77 = por %p75, %p76
      %p78 = scmp.ne.s32.totalorder %s70, %s72
      %p79 = scmp.eq.s32.totalorder %s20, 1
      %p80 = por %p78, %p79
      %p81 = scmp.ne.s32.totalorder %s72, %s73
      %p82 = scmp.eq.s32.totalorder %s20, 0
      %p83 = por %p81, %p82
      %p84 = scmp.ne.s32.totalorder %s72, %s73
      %p85 = scmp.eq.s32.totalorder %s21, 1
      %p86 = por %p84, %p85
      %p88 = scmp.ne.s32.totalorder %s73, %s87
      %p89 = scmp.eq.s32.totalorder %s21, 0
      %p90 = por %p88, %p89
      %s92 = sadd.s32 %s91, 1
      %p95 = scmp.eq.s32.totalorder %s15, 1
      %p96 = scmp.ne.s32.totalorder %s91, %s93
      %p97 = scmp.eq.s32.totalorder %s15, 0
      %p98 = por %p96, %p97
      %p99 = scmp.ne.s32.totalorder %s91, %s93
      %p100 = scmp.eq.s32.totalorder %s20, 1
      %p101 = por %p99, %p100
      %p102 = scmp.ne.s32.totalorder %s93, %s94
      %p103 = scmp.eq.s32.totalorder %s20, 0
      %p104 = por %p102, %p103
      %p105 = scmp.ne.s32.totalorder %s93, %s94
      %p106 = scmp.eq.s32.totalorder %s21, 1
      %p107 = por %p105, %p106
      %p109 = scmp.ne.s32.totalorder %s94, %s108
      %p110 = scmp.eq.s32.totalorder %s21, 0
      %p111 = por %p109, %p110
      %s113 = sadd.s32 %s112, 1
      %p116 = scmp.eq.s32.totalorder %s15, 1
      %p117 = scmp.ne.s32.totalorder %s112, %s114
      %p118 = scmp.eq.s32.totalorder %s15, 0
      %p119 = por %p117, %p118
      %p120 = scmp.ne.s32.totalorder %s112, %s114
      %p121 = scmp.eq.s32.totalorder %s20, 1
      %p122 = por %p120, %p121
      %p123 = scmp.ne.s32.totalorder %s114, %s115
      %p124 = scmp.eq.s32.totalorder %s20, 0
      %p125 = por %p123, %p124
      %p126 = scmp.ne.s32.totalorder %s114, %s115
      %p127 = scmp.eq.s32.totalorder %s21, 1
      %p128 = por %p126, %p127
      %p130 = scmp.ne.s32.totalorder %s115, %s129
      %p131 = scmp.eq.s32.totalorder %s21, 0
      %p132 = por %p130, %p131
      %s133 = ssub.s32 %s15, %s22
      %p134 = scmp.eq.s32.totalorder %s133, 0
      %s136 = sadd.s32 %s135, 1
      %s137 = scalar_select %p134, %s135, %s136
      %p140 = pneg %p134
      %p141 = scmp.eq.s32.totalorder %s15, 1
      %p142 = por %p140, %p141
      %p143 = scmp.ne.s32.totalorder %s135, %s138
      %p144 = scmp.eq.s32.totalorder %s15, 0
      %p145 = por %p143, %p144
      %p146 = scmp.ne.s32.totalorder %s135, %s138
      %p147 = scmp.eq.s32.totalorder %s20, 1
      %p148 = por %p146, %p147
      %p149 = scmp.ne.s32.totalorder %s138, %s139
      %p150 = scmp.eq.s32.totalorder %s20, 0
      %p151 = por %p149, %p150
      %p152 = scmp.ne.s32.totalorder %s138, %s139
      %p153 = scmp.eq.s32.totalorder %s21, 1
      %p154 = por %p152, %p153
      %p156 = scmp.ne.s32.totalorder %s139, %s155
      %p157 = scmp.eq.s32.totalorder %s21, 0
      %p158 = por %p156, %p157
      %p159 = scmp.le.s32.totalorder 1, %s15
      %p160 = scmp.lt.s32.totalorder %s15, 3
      %p161 = pnand %p159, %p160
      %p162 = pneg %p161
      // Predicated region
      $region9: #{tpu_custom_call.1} parent=5 // pred_check
        _
      $region10: #{tpu_custom_call.1} parent=5 // pred_check_branch
        %164 = sbr.rel (%p161) target = $region12
      $region11: #{tpu_custom_call.1} parent=5 // pred_region
        %s165 = ssub.s32 %s15, 1
        // Predicated region
        $region13: #{tpu_custom_call.1} parent=11 // pred_check
          %p166 = pneg %p62
        $region14: #{tpu_custom_call.1} parent=11 // pred_check_branch
          %168 = sbr.rel (%p166) target = $region16
        $region15: #{tpu_custom_call.1} parent=11 // pred_region
          _
        $region16: #{tpu_custom_call.1} parent=11 // pred_fallthru
          _
        // Predicated region
        $region17: #{tpu_custom_call.1} parent=11 // pred_check
          %p169 = pneg %p83
        $region18: #{tpu_custom_call.1} parent=11 // pred_check_branch
          %171 = sbr.rel (%p169) target = $region20
        $region19: #{tpu_custom_call.1} parent=11 // pred_region
          _
        $region20: #{tpu_custom_call.1} parent=11 // pred_fallthru
          _
        // Predicated region
        $region21: #{tpu_custom_call.1} parent=11 // pred_check
          %p172 = pneg %p104
        $region22: #{tpu_custom_call.1} parent=11 // pred_check_branch
          %174 = sbr.rel (%p172) target = $region24
        $region23: #{tpu_custom_call.1} parent=11 // pred_region
          _
        $region24: #{tpu_custom_call.1} parent=11 // pred_fallthru
          _
        // Predicated region
        $region25: #{tpu_custom_call.1} parent=11 // pred_check
          %p175 = pneg %p125
        $region26: #{tpu_custom_call.1} parent=11 // pred_check_branch
          %177 = sbr.rel (%p175) target = $region28
        $region27: #{tpu_custom_call.1} parent=11 // pred_region
          %s179 = ssub.s32 64, 64
          %180 = vsyncadd [#allocation4], %s179
          %s182 = sshll.u32 %s4, 4
          %s183 = int_to_ptr.vmem [resolvable:$true] %s182
          %185 = dma.vmem_to_smem %s183, 64, [#allocation2], [#allocation4]
        $region28: #{tpu_custom_call.1} parent=11 // pred_fallthru
          _
      $region12: #{tpu_custom_call.1} parent=5 // pred_fallthru
        _
      %p186 = scmp.lt.s32.totalorder %s15, 2
      // Predicated region
      $region29: #{tpu_custom_call.1} parent=5 // pred_check
        %p187 = pneg %p186
      $region30: #{tpu_custom_call.1} parent=5 // pred_check_branch
        %189 = sbr.rel (%p187) target = $region32
      $region31: #{tpu_custom_call.1} parent=5 // pred_region
        // Predicated region
        $region33: #{tpu_custom_call.1} parent=31 // pred_check
          %p190 = pneg %p35
        $region34: #{tpu_custom_call.1} parent=31 // pred_check_branch
          %192 = sbr.rel (%p190) target = $region36
        $region35: #{tpu_custom_call.1} parent=31 // pred_region
          %s193 = smul.u32 5, %s15
          %s194 = ssub.s32 9, %s193
          %p195 = scmp.lt.s32.totalorder %s194, 5
          %s196 = scalar_select %p195, %s194, 5
          %s197 = smul.u32 128, %s196
          %p198 = scmp.lt.s32.totalorder %s193, 8
          %s199 = scalar_select %p198, %s193, 8
          %s200 = smul.addr %s199, 8
          %s201 = scalar_lea.vmem %s0, %s200
          %s202 = smul.u32 5, %s15
          %s203 = ssub.s32 9, %s202
          %p204 = scmp.lt.s32.totalorder %s203, 5
          %s205 = scalar_select %p204, %s203, 5
          %s206 = smul.u32 128, %s205
        $region36: #{tpu_custom_call.1} parent=31 // pred_fallthru
          _
      $region32: #{tpu_custom_call.1} parent=5 // pred_fallthru
        _
      %p207 = scmp.le.s32.totalorder 1, %s15
      %p208 = scmp.lt.s32.totalorder %s15, 3
      %p209 = pnand %p207, %p208
      %p210 = pneg %p209
      // Predicated region
      $region37: #{tpu_custom_call.1} parent=5 // pred_check
        _
      $region38: #{tpu_custom_call.1} parent=5 // pred_check_branch
        %212 = sbr.rel (%p209) target = $region40
      $region39: #{tpu_custom_call.1} parent=5 // pred_region
        %s213 = ssub.s32 %s15, 1
        // Predicated region
        $region41: #{tpu_custom_call.1} parent=39 // pred_check
          %p214 = pneg %p125
        $region42: #{tpu_custom_call.1} parent=39 // pred_check_branch
          %216 = sbr.rel (%p214) target = $region44
        $region43: #{tpu_custom_call.1} parent=39 // pred_region
          %217 = dma.done [#allocation4], 64
        $region44: #{tpu_custom_call.1} parent=39 // pred_fallthru
          _
        %218 = sfence
        %s219 = smul.u32 5, %s20
        %s220 = ssub.s32 9, %s219
        %p221 = scmp.lt.s32.totalorder %s220, 5
        %s222 = scalar_select %p221, %s220, 5
        %s223 = smul.u32 128, %s222
        %p224 = scmp.lt.s32.totalorder %s219, 8
        %s225 = scalar_select %p224, %s219, 8
        %s226 = smul.addr %s225, 8
        %s227 = scalar_lea.vmem %s0, %s226
        %p228 = pneg %p41
        %p229 = pneg %p38
        %p230 = pneg %p62
        %p231 = pneg %p59
        %p232 = pneg %p83
        %p233 = pneg %p80
        %p234 = pneg %p104
        %p235 = pneg %p101
        %p236 = pneg %p125
        %p237 = pneg %p122
        %p238 = pneg %p151
        %p239 = pneg %p148
        %s240 = sand.u32 %s138, 1
        %s241 = scalar_lea.sflag [#allocation3], %s240
        %s242 = sand.u32 %s138, 1
        %s243 = smul.addr %s242, 240
        %s244 = scalar_lea.vmem [#allocation5], %s243
        %s245 = smul.u32 5, %s20
        %s246 = ssub.s32 9, %s245
        %p247 = scmp.lt.s32.totalorder %s246, 5
        %s248 = scalar_select %p247, %s246, 5
        %s249 = smul.u32 128, %s248
        %p250 = scmp.lt.s32.totalorder %s245, 8
        %s251 = scalar_select %p250, %s245, 8
        %s252 = smul.addr %s251, 8
        %s253 = scalar_lea.vmem %s0, %s252
        %s254 = smul.u32 5, %s20
        %s255 = ssub.s32 9, %s254
        %p256 = scmp.lt.s32.totalorder %s255, 5
        %s257 = scalar_select %p256, %s255, 5
        %s258 = smul.u32 128, %s257
        %s259 = smul.u32 5, %s20
        %s260 = ssub.s32 9, %s259
        %p261 = scmp.lt.s32.totalorder %s260, 5
        %s262 = scalar_select %p261, %s260, 5
        %s263 = smul.u32 128, %s262
        %s264 = smul.u32 %s263, 3
        %s265 = smul.u32 %s264, 2
        %v266 = vld [vmem:[%s1] sm:$0x3]
        %v267 = vld [vmem:[%s3] sm:$0x3]
        %v268 = vld [vmem:[%s253] sm:$0xff]
        %v269 = vld [vmem:[%s253 + $0x8] sm:$0xff]
        %v270 = vld [vmem:[%s253 + $0x10] sm:$0xff]
        %v271 = vld [vmem:[%s253 + $0x18] sm:$0xff]
        %v272 = vld [vmem:[%s253 + $0x20] sm:$0xff]
        %s273 = sld [smem:[#allocation2]]
        %s274 = sld [smem:[#allocation2 + $0x80]]
        %s275 = sld [smem:[#allocation2 + $0x100]]
        %v276 = vstv %s273
        %v277 = vmul.f32 %v268, %v276
        %v278 = vmul.f32 %v269, %v276
        %v279 = vmul.f32 %v270, %v276
        %v280 = vmul.f32 %v271, %v276
        %v281 = vmul.f32 %v272, %v276
        %v282 = vstv %s274
        %v283 = vadd.f32 %v277, %v282
        %v284 = vadd.f32 %v278, %v282
        %v285 = vadd.f32 %v279, %v282
        %v286 = vadd.f32 %v280, %v282
        %v287 = vadd.f32 %v281, %v282
        %v288 = vmul.f32 %v283, %v268
        %v289 = vmul.f32 %v284, %v269
        %v290 = vmul.f32 %v285, %v270
        %v291 = vmul.f32 %v286, %v271
        %v292 = vmul.f32 %v287, %v272
        %v293 = vstv %s275
        %v294 = vadd.f32 %v288, %v293
        %v295 = vadd.f32 %v289, %v293
        %v296 = vadd.f32 %v290, %v293
        %v297 = vadd.f32 %v291, %v293
        %v298 = vadd.f32 %v292, %v293
        %v299 = vmax.f32 %v294, 0.0
        %v300 = vmax.f32 %v295, 0.0
        %v301 = vmax.f32 %v296, 0.0
        %v302 = vmax.f32 %v297, 0.0
        %v303 = vmax.f32 %v298, 0.0
        %v304 = vadd.f32 %v299, 1e-05
        %v305 = vadd.f32 %v300, 1e-05
        %v306 = vadd.f32 %v301, 1e-05
        %v307 = vadd.f32 %v302, 1e-05
        %v308 = vadd.f32 %v303, 1e-05
        %v309 = vrsqrt.pop %v304
        %v310 = vrsqrt.pop %v305
        %v311 = vrsqrt.pop %v306
        %v312 = vrsqrt.pop %v307
        %v313 = vrsqrt.pop %v308
        %315 = vset.pattern.permute.xlu0 0
        %316 = vperm.xlu0 %315, %v268
        %v317 = vpop.permute.xlu0 %316
        %320 = vset.pattern.permute.xlu0 0
        %321 = vperm.xlu0 %320, %v269
        %v322 = vpop.permute.xlu0 %321
        %325 = vset.pattern.permute.xlu0 0
        %326 = vperm.xlu0 %325, %v270
        %v327 = vpop.permute.xlu0 %326
        %330 = vset.pattern.permute.xlu0 0
        %331 = vperm.xlu0 %330, %v271
        %v332 = vpop.permute.xlu0 %331
        %335 = vset.pattern.permute.xlu0 0
        %336 = vperm.xlu0 %335, %v272
        %v337 = vpop.permute.xlu0 %336
        %v340 = vlaneseq
        %v341 = vshrl.u32 %v340, 7
        %v342 = vsub.s32 0, %v341
        %v343 = vrot.slane %v266, %v342
        %v344 = vlaneseq
        %v345 = vshrl.u32 %v344, 7
        %v346 = vsub.s32 1, %v345
        %v347 = vrot.slane %v266, %v346
        %v350 = vmul.f32 %v317, %v343
        %v351 = vmul.f32 %v317, %v347
        %v352 = vmul.f32 %v322, %v343
        %v353 = vmul.f32 %v322, %v347
        %v354 = vmul.f32 %v327, %v343
        %v355 = vmul.f32 %v327, %v347
        %v356 = vmul.f32 %v332, %v343
        %v357 = vmul.f32 %v332, %v347
        %v358 = vmul.f32 %v337, %v343
        %v359 = vmul.f32 %v337, %v347
        %v360 = vld [vmem:[%s2] ss:$4 sm:$0x3]
        %v362 = vlaneseq
        %v363 = vshrl.u32 %v362, 7
        %v364 = vsub.s32 0, %v363
        %v365 = vrot.slane %v360, %v364
        %v366 = vlaneseq
        %v367 = vshrl.u32 %v366, 7
        %v368 = vsub.s32 1, %v367
        %v369 = vrot.slane %v360, %v368
        %v372 = vadd.f32 %v350, %v365
        %v373 = vadd.f32 %v351, %v369
        %v374 = vadd.f32 %v352, %v365
        %v375 = vadd.f32 %v353, %v369
        %v376 = vadd.f32 %v354, %v365
        %v377 = vadd.f32 %v355, %v369
        %v378 = vadd.f32 %v356, %v365
        %v379 = vadd.f32 %v357, %v369
        %v380 = vadd.f32 %v358, %v365
        %v381 = vadd.f32 %v359, %v369
        %383 = vset.pattern.permute.xlu0 0
        %384 = vperm.xlu0 %383, %v309
        %v385 = vpop.permute.xlu0 %384
        %388 = vset.pattern.permute.xlu0 0
        %389 = vperm.xlu0 %388, %v310
        %v390 = vpop.permute.xlu0 %389
        %393 = vset.pattern.permute.xlu0 0
        %394 = vperm.xlu0 %393, %v311
        %v395 = vpop.permute.xlu0 %394
        %398 = vset.pattern.permute.xlu0 0
        %399 = vperm.xlu0 %398, %v312
        %v400 = vpop.permute.xlu0 %399
        %403 = vset.pattern.permute.xlu0 0
        %404 = vperm.xlu0 %403, %v313
        %v405 = vpop.permute.xlu0 %404
        %v407 = vmul.f32 %v372, %v385
        %v408 = vmul.f32 %v373, %v385
        %v409 = vmul.f32 %v374, %v390
        %v410 = vmul.f32 %v375, %v390
        %v411 = vmul.f32 %v376, %v395
        %v412 = vmul.f32 %v377, %v395
        %v413 = vmul.f32 %v378, %v400
        %v414 = vmul.f32 %v379, %v400
        %v415 = vmul.f32 %v380, %v405
        %v416 = vmul.f32 %v381, %v405
        %v418 = vlaneseq
        %v419 = vshrl.u32 %v418, 7
        %v420 = vsub.s32 0, %v419
        %v421 = vrot.slane %v267, %v420
        %v422 = vlaneseq
        %v423 = vshrl.u32 %v422, 7
        %v424 = vsub.s32 1, %v423
        %v425 = vrot.slane %v267, %v424
        %v428 = vadd.f32 %v407, %v421
        %v429 = vadd.f32 %v408, %v425
        %v430 = vadd.f32 %v409, %v421
        %v431 = vadd.f32 %v410, %v425
        %v432 = vadd.f32 %v411, %v421
        %v433 = vadd.f32 %v412, %v425
        %v434 = vadd.f32 %v413, %v421
        %v435 = vadd.f32 %v414, %v425
        %v436 = vadd.f32 %v415, %v421
        %v437 = vadd.f32 %v416, %v425
        %438 = vst [vmem:[%s244] sm:$0xff] %v428
        %439 = vst [vmem:[%s244 + $0x8] sm:$0xff] %v429
        %440 = vst [vmem:[%s244 + $0x30] sm:$0xff] %v430
        %441 = vst [vmem:[%s244 + $0x38] sm:$0xff] %v431
        %442 = vst [vmem:[%s244 + $0x60] sm:$0xff] %v432
        %443 = vst [vmem:[%s244 + $0x68] sm:$0xff] %v433
        %444 = vst [vmem:[%s244 + $0x90] sm:$0xff] %v434
        %445 = vst [vmem:[%s244 + $0x98] sm:$0xff] %v435
        %446 = vst [vmem:[%s244 + $0xc0] sm:$0xff] %v436
        %447 = vst [vmem:[%s244 + $0xc8] sm:$0xff] %v437
        %v448 = vld [vmem:[%s253] sm:$0xff]
        %v449 = vld [vmem:[%s253 + $0x8] sm:$0xff]
        %v450 = vld [vmem:[%s253 + $0x10] sm:$0xff]
        %v451 = vld [vmem:[%s253 + $0x18] sm:$0xff]
        %v452 = vld [vmem:[%s253 + $0x20] sm:$0xff]
        %s453 = sld [smem:[#allocation2 + $0x1]]
        %s454 = sld [smem:[#allocation2 + $0x81]]
        %s455 = sld [smem:[#allocation2 + $0x101]]
        %v456 = vstv %s453
        %v457 = vmul.f32 %v448, %v456
        %v458 = vmul.f32 %v449, %v456
        %v459 = vmul.f32 %v450, %v456
        %v460 = vmul.f32 %v451, %v456
        %v461 = vmul.f32 %v452, %v456
        %v462 = vstv %s454
        %v463 = vadd.f32 %v457, %v462
        %v464 = vadd.f32 %v458, %v462
        %v465 = vadd.f32 %v459, %v462
        %v466 = vadd.f32 %v460, %v462
        %v467 = vadd.f32 %v461, %v462
        %v468 = vmul.f32 %v463, %v448
        %v469 = vmul.f32 %v464, %v449
        %v470 = vmul.f32 %v465, %v450
        %v471 = vmul.f32 %v466, %v451
        %v472 = vmul.f32 %v467, %v452
        %v473 = vstv %s455
        %v474 = vadd.f32 %v468, %v473
        %v475 = vadd.f32 %v469, %v473
        %v476 = vadd.f32 %v470, %v473
        %v477 = vadd.f32 %v471, %v473
        %v478 = vadd.f32 %v472, %v473
        %v479 = vmax.f32 %v474, 0.0
        %v480 = vmax.f32 %v475, 0.0
        %v481 = vmax.f32 %v476, 0.0
        %v482 = vmax.f32 %v477, 0.0
        %v483 = vmax.f32 %v478, 0.0
        %v484 = vadd.f32 %v479, 1e-05
        %v485 = vadd.f32 %v480, 1e-05
        %v486 = vadd.f32 %v481, 1e-05
        %v487 = vadd.f32 %v482, 1e-05
        %v488 = vadd.f32 %v483, 1e-05
        %v489 = vrsqrt.pop %v484
        %v490 = vrsqrt.pop %v485
        %v491 = vrsqrt.pop %v486
        %v492 = vrsqrt.pop %v487
        %v493 = vrsqrt.pop %v488
        %495 = vset.pattern.permute.xlu0 1
        %496 = vperm.xlu0 %495, %v448
        %v497 = vpop.permute.xlu0 %496
        %500 = vset.pattern.permute.xlu0 1
        %501 = vperm.xlu0 %500, %v449
        %v502 = vpop.permute.xlu0 %501
        %505 = vset.pattern.permute.xlu0 1
        %506 = vperm.xlu0 %505, %v450
        %v507 = vpop.permute.xlu0 %506
        %510 = vset.pattern.permute.xlu0 1
        %511 = vperm.xlu0 %510, %v451
        %v512 = vpop.permute.xlu0 %511
        %515 = vset.pattern.permute.xlu0 1
        %516 = vperm.xlu0 %515, %v452
        %v517 = vpop.permute.xlu0 %516
        %v519 = vmul.f32 %v497, %v343
        %v520 = vmul.f32 %v497, %v347
        %v521 = vmul.f32 %v502, %v343
        %v522 = vmul.f32 %v502, %v347
        %v523 = vmul.f32 %v507, %v343
        %v524 = vmul.f32 %v507, %v347
        %v525 = vmul.f32 %v512, %v343
        %v526 = vmul.f32 %v512, %v347
        %v527 = vmul.f32 %v517, %v343
        %v528 = vmul.f32 %v517, %v347
        %s529 = scalar_lea.vmem %s2, 1
        %v530 = vld [vmem:[%s529] ss:$4 sm:$0x3]
        %v532 = vlaneseq
        %v533 = vshrl.u32 %v532, 7
        %v534 = vsub.s32 0, %v533
        %v535 = vrot.slane %v530, %v534
        %v536 = vlaneseq
        %v537 = vshrl.u32 %v536, 7
        %v538 = vsub.s32 1, %v537
        %v539 = vrot.slane %v530, %v538
        %v542 = vadd.f32 %v519, %v535
        %v543 = vadd.f32 %v520, %v539
        %v544 = vadd.f32 %v521, %v535
        %v545 = vadd.f32 %v522, %v539
        %v546 = vadd.f32 %v523, %v535
        %v547 = vadd.f32 %v524, %v539
        %v548 = vadd.f32 %v525, %v535
        %v549 = vadd.f32 %v526, %v539
        %v550 = vadd.f32 %v527, %v535
        %v551 = vadd.f32 %v528, %v539
        %553 = vset.pattern.permute.xlu0 1
        %554 = vperm.xlu0 %553, %v489
        %v555 = vpop.permute.xlu0 %554
        %558 = vset.pattern.permute.xlu0 1
        %559 = vperm.xlu0 %558, %v490
        %v560 = vpop.permute.xlu0 %559
        %563 = vset.pattern.permute.xlu0 1
        %564 = vperm.xlu0 %563, %v491
        %v565 = vpop.permute.xlu0 %564
        %568 = vset.pattern.permute.xlu0 1
        %569 = vperm.xlu0 %568, %v492
        %v570 = vpop.permute.xlu0 %569
        %573 = vset.pattern.permute.xlu0 1
        %574 = vperm.xlu0 %573, %v493
        %v575 = vpop.permute.xlu0 %574
        %v577 = vmul.f32 %v542, %v555
        %v578 = vmul.f32 %v543, %v555
        %v579 = vmul.f32 %v544, %v560
        %v580 = vmul.f32 %v545, %v560
        %v581 = vmul.f32 %v546, %v565
        %v582 = vmul.f32 %v547, %v565
        %v583 = vmul.f32 %v548, %v570
        %v584 = vmul.f32 %v549, %v570
        %v585 = vmul.f32 %v550, %v575
        %v586 = vmul.f32 %v551, %v575
        %v587 = vadd.f32 %v577, %v421
        %v588 = vadd.f32 %v578, %v425
        %v589 = vadd.f32 %v579, %v421
        %v590 = vadd.f32 %v580, %v425
        %v591 = vadd.f32 %v581, %v421
        %v592 = vadd.f32 %v582, %v425
        %v593 = vadd.f32 %v583, %v421
        %v594 = vadd.f32 %v584, %v425
        %v595 = vadd.f32 %v585, %v421
        %v596 = vadd.f32 %v586, %v425
        %s597 = scalar_lea.vmem %s244, 16 [#allocation5]
        %598 = vst [vmem:[%s597] sm:$0xff] %v587
        %599 = vst [vmem:[%s597 + $0x8] sm:$0xff] %v588
        %600 = vst [vmem:[%s597 + $0x30] sm:$0xff] %v589
        %601 = vst [vmem:[%s597 + $0x38] sm:$0xff] %v590
        %602 = vst [vmem:[%s597 + $0x60] sm:$0xff] %v591
        %603 = vst [vmem:[%s597 + $0x68] sm:$0xff] %v592
        %604 = vst [vmem:[%s597 + $0x90] sm:$0xff] %v593
        %605 = vst [vmem:[%s597 + $0x98] sm:$0xff] %v594
        %606 = vst [vmem:[%s597 + $0xc0] sm:$0xff] %v595
        %607 = vst [vmem:[%s597 + $0xc8] sm:$0xff] %v596
        %v608 = vld [vmem:[%s253] sm:$0xff]
        %v609 = vld [vmem:[%s253 + $0x8] sm:$0xff]
        %v610 = vld [vmem:[%s253 + $0x10] sm:$0xff]
        %v611 = vld [vmem:[%s253 + $0x18] sm:$0xff]
        %v612 = vld [vmem:[%s253 + $0x20] sm:$0xff]
        %s613 = sld [smem:[#allocation2 + $0x2]]
        %s614 = sld [smem:[#allocation2 + $0x82]]
        %s615 = sld [smem:[#allocation2 + $0x102]]
        %v616 = vstv %s613
        %v617 = vmul.f32 %v608, %v616
        %v618 = vmul.f32 %v609, %v616
        %v619 = vmul.f32 %v610, %v616
        %v620 = vmul.f32 %v611, %v616
        %v621 = vmul.f32 %v612, %v616
        %v622 = vstv %s614
        %v623 = vadd.f32 %v617, %v622
        %v624 = vadd.f32 %v618, %v622
        %v625 = vadd.f32 %v619, %v622
        %v626 = vadd.f32 %v620, %v622
        %v627 = vadd.f32 %v621, %v622
        %v628 = vmul.f32 %v623, %v608
        %v629 = vmul.f32 %v624, %v609
        %v630 = vmul.f32 %v625, %v610
        %v631 = vmul.f32 %v626, %v611
        %v632 = vmul.f32 %v627, %v612
        %v633 = vstv %s615
        %v634 = vadd.f32 %v628, %v633
        %v635 = vadd.f32 %v629, %v633
        %v636 = vadd.f32 %v630, %v633
        %v637 = vadd.f32 %v631, %v633
        %v638 = vadd.f32 %v632, %v633
        %v639 = vmax.f32 %v634, 0.0
        %v640 = vmax.f32 %v635, 0.0
        %v641 = vmax.f32 %v636, 0.0
        %v642 = vmax.f32 %v637, 0.0
        %v643 = vmax.f32 %v638, 0.0
        %v644 = vadd.f32 %v639, 1e-05
        %v645 = vadd.f32 %v640, 1e-05
        %v646 = vadd.f32 %v641, 1e-05
        %v647 = vadd.f32 %v642, 1e-05
        %v648 = vadd.f32 %v643, 1e-05
        %v649 = vrsqrt.pop %v644
        %v650 = vrsqrt.pop %v645
        %v651 = vrsqrt.pop %v646
        %v652 = vrsqrt.pop %v647
        %v653 = vrsqrt.pop %v648
        %655 = vset.pattern.permute.xlu0 2
        %656 = vperm.xlu0 %655, %v608
        %v657 = vpop.permute.xlu0 %656
        %660 = vset.pattern.permute.xlu0 2
        %661 = vperm.xlu0 %660, %v609
        %v662 = vpop.permute.xlu0 %661
        %665 = vset.pattern.permute.xlu0 2
        %666 = vperm.xlu0 %665, %v610
        %v667 = vpop.permute.xlu0 %666
        %670 = vset.pattern.permute.xlu0 2
        %671 = vperm.xlu0 %670, %v611
        %v672 = vpop.permute.xlu0 %671
        %675 = vset.pattern.permute.xlu0 2
        %676 = vperm.xlu0 %675, %v612
        %v677 = vpop.permute.xlu0 %676
        %v679 = vmul.f32 %v657, %v343
        %v680 = vmul.f32 %v657, %v347
        %v681 = vmul.f32 %v662, %v343
        %v682 = vmul.f32 %v662, %v347
        %v683 = vmul.f32 %v667, %v343
        %v684 = vmul.f32 %v667, %v347
        %v685 = vmul.f32 %v672, %v343
        %v686 = vmul.f32 %v672, %v347
        %v687 = vmul.f32 %v677, %v343
        %v688 = vmul.f32 %v677, %v347
        %s689 = scalar_lea.vmem %s2, 2
        %v690 = vld [vmem:[%s689] ss:$4 sm:$0x3]
        %v692 = vlaneseq
        %v693 = vshrl.u32 %v692, 7
        %v694 = vsub.s32 0, %v693
        %v695 = vrot.slane %v690, %v694
        %v696 = vlaneseq
        %v697 = vshrl.u32 %v696, 7
        %v698 = vsub.s32 1, %v697
        %v699 = vrot.slane %v690, %v698
        %v702 = vadd.f32 %v679, %v695
        %v703 = vadd.f32 %v680, %v699
        %v704 = vadd.f32 %v681, %v695
        %v705 = vadd.f32 %v682, %v699
        %v706 = vadd.f32 %v683, %v695
        %v707 = vadd.f32 %v684, %v699
        %v708 = vadd.f32 %v685, %v695
        %v709 = vadd.f32 %v686, %v699
        %v710 = vadd.f32 %v687, %v695
        %v711 = vadd.f32 %v688, %v699
        %713 = vset.pattern.permute.xlu0 2
        %714 = vperm.xlu0 %713, %v649
        %v715 = vpop.permute.xlu0 %714
        %718 = vset.pattern.permute.xlu0 2
        %719 = vperm.xlu0 %718, %v650
        %v720 = vpop.permute.xlu0 %719
        %723 = vset.pattern.permute.xlu0 2
        %724 = vperm.xlu0 %723, %v651
        %v725 = vpop.permute.xlu0 %724
        %728 = vset.pattern.permute.xlu0 2
        %729 = vperm.xlu0 %728, %v652
        %v730 = vpop.permute.xlu0 %729
        %733 = vset.pattern.permute.xlu0 2
        %734 = vperm.xlu0 %733, %v653
        %v735 = vpop.permute.xlu0 %734
        %v737 = vmul.f32 %v702, %v715
        %v738 = vmul.f32 %v703, %v715
        %v739 = vmul.f32 %v704, %v720
        %v740 = vmul.f32 %v705, %v720
        %v741 = vmul.f32 %v706, %v725
        %v742 = vmul.f32 %v707, %v725
        %v743 = vmul.f32 %v708, %v730
        %v744 = vmul.f32 %v709, %v730
        %v745 = vmul.f32 %v710, %v735
        %v746 = vmul.f32 %v711, %v735
        %v747 = vadd.f32 %v737, %v421
        %v748 = vadd.f32 %v738, %v425
        %v749 = vadd.f32 %v739, %v421
        %v750 = vadd.f32 %v740, %v425
        %v751 = vadd.f32 %v741, %v421
        %v752 = vadd.f32 %v742, %v425
        %v753 = vadd.f32 %v743, %v421
        %v754 = vadd.f32 %v744, %v425
        %v755 = vadd.f32 %v745, %v421
        %v756 = vadd.f32 %v746, %v425
        %s757 = scalar_lea.vmem %s244, 32 [#allocation5]
        %758 = vst [vmem:[%s757] sm:$0xff] %v747
        %759 = vst [vmem:[%s757 + $0x8] sm:$0xff] %v748
        %760 = vst [vmem:[%s757 + $0x30] sm:$0xff] %v749
        %761 = vst [vmem:[%s757 + $0x38] sm:$0xff] %v750
        %762 = vst [vmem:[%s757 + $0x60] sm:$0xff] %v751
        %763 = vst [vmem:[%s757 + $0x68] sm:$0xff] %v752
        %764 = vst [vmem:[%s757 + $0x90] sm:$0xff] %v753
        %765 = vst [vmem:[%s757 + $0x98] sm:$0xff] %v754
        %766 = vst [vmem:[%s757 + $0xc0] sm:$0xff] %v755
        %767 = vst [vmem:[%s757 + $0xc8] sm:$0xff] %v756
        %s768 = sand.u32 %s138, 1
        %s769 = scalar_lea.sflag [#allocation3], %s768
        %s770 = sand.u32 %s138, 1
        %s771 = smul.addr %s770, 240
        %s772 = scalar_lea.vmem [#allocation5], %s771
        // Predicated region
        $region45: #{tpu_custom_call.1} parent=39 // pred_check
          %p773 = pneg %p148
        $region46: #{tpu_custom_call.1} parent=39 // pred_check_branch
          %775 = sbr.rel (%p773) target = $region48
        $region47: #{tpu_custom_call.1} parent=39 // pred_region
          %s776 = smul.u32 5, %s20
          %s777 = ssub.s32 9, %s776
          %p778 = scmp.lt.s32.totalorder %s777, 5
          %s779 = scalar_select %p778, %s777, 5
          %s780 = smul.u32 128, %s779
          %s781 = smul.u32 %s780, 3
          %s782 = smul.u32 %s781, 2
          %s784 = ssub.s32 3840, %s782
          %785 = vsyncadd %s769, %s784
          %p786 = scmp.ne.s32.totalorder 0, %s782
          %s787 = smul.addr %s776, 6
          %s788 = smul.addr %s787, 128
          %s789 = scalar_lea.hbm %s5, %s788
          %s790 = smul.u32 %s779, 3
          %s791 = smul.u32 16, %s790
          %s792 = sshll.u32 %s772, 4
          %s793 = int_to_ptr.vmem [resolvable:$true] %s792
          %s794 = sshll.u32 %s791, 4
          %798 = dma.vmem_to_hbm [thread:$0]  (%p786), %s793, %s794, %s789, %s769, 256, 256, 16
        $region48: #{tpu_custom_call.1} parent=39 // pred_fallthru
          _
      $region40: #{tpu_custom_call.1} parent=5 // pred_fallthru
        _
      %p799 = scmp.le.s32.totalorder 2, %s15
      // Predicated region
      $region49: #{tpu_custom_call.1} parent=5 // pred_check
        %p800 = pneg %p799
      $region50: #{tpu_custom_call.1} parent=5 // pred_check_branch
        %802 = sbr.rel (%p800) target = $region52
      $region51: #{tpu_custom_call.1} parent=5 // pred_region
        %s803 = ssub.s32 %s15, 2
        // Predicated region
        $region53: #{tpu_custom_call.1} parent=51 // pred_check
          %p804 = pneg %p154
        $region54: #{tpu_custom_call.1} parent=51 // pred_check_branch
          %806 = sbr.rel (%p804) target = $region56
        $region55: #{tpu_custom_call.1} parent=51 // pred_region
          %s807 = sand.u32 %s139, 1
          %s808 = scalar_lea.sflag [#allocation3], %s807
          %s809 = sand.u32 %s139, 1
          %s810 = smul.addr %s809, 240
          %s811 = scalar_lea.vmem [#allocation5], %s810
          %812 = dma.done %s808, 3840
        $region56: #{tpu_custom_call.1} parent=51 // pred_fallthru
          _
      $region52: #{tpu_custom_call.1} parent=5 // pred_fallthru
        _
    $region6: #{tpu_custom_call.1} parent=1 // loop_footer
      %s19 = sadd.s32 1, %s15
    $region7: #{tpu_custom_call.1} parent=1 // loop_footer_branch
      %14 = sbr.rel target = $region3
    $region8: #{tpu_custom_call.1} parent=1 // loop_exit
      _
    %813 = vsyncpa [#allocation3], 1
    %s814 = scalar_lea.sflag [#allocation3], 1
    %815 = vsyncpa %s814, 1
    %816 = vsyncpa [#allocation4], 1
    %s817 = scalar_lea.sflag [#allocation4], 1
    %818 = vsyncpa %s817, 1

</llo_original>
